<compile_context>
chip_gen: v5e
topology: v5e:2x2
jax: 0.10.0
libtpu: 0.0.40
codegen_flags: <defaults>
</compile_context>

<pallas_src>
import functools

import numpy as np
import jax
import jax.numpy as jnp
from jax import lax
from jax.experimental import pallas as pl
from jax.experimental.pallas import tpu as pltpu


_LANE = 128
_SUBLANE = 8


def _cdiv(a, b):
    return -(-a // b)


def _round_up(x, m):
    return _cdiv(x, m) * m


# ---------------------------------------------------------------------------
# Kernel 1: global average pool  (AdaptiveAvgPool2d((1,1)) + view(N, -1))
# ---------------------------------------------------------------------------
def _gap_kernel(x_ref, o_ref, *, inv_hw):
    # x_ref: (TN, C, HW) ; o_ref: (TN, C)
    x = x_ref[...].astype(jnp.float32)            # f32 accumulation (bf16-safe)
    o_ref[...] = (jnp.sum(x, axis=-1) * inv_hw).astype(o_ref.dtype)


def _gap_reduce_kernel(x_ref, o_ref, acc_ref, *, inv_hw, hw_total, thw, need_mask):
    # x_ref: (TN, C, THW) chunk of the spatial axis ; acc_ref: (TN, C) f32
    k = pl.program_id(1)

    @pl.when(k == 0)
    def _():
        acc_ref[...] = jnp.zeros_like(acc_ref)

    x = x_ref[...].astype(jnp.float32)
    if need_mask:
        # Ragged last HW chunk: zero the out-of-bounds (garbage) columns.
        col = lax.broadcasted_iota(jnp.int32, x.shape, 2) + k * thw
        x = jnp.where(col < hw_total, x, 0.0)
    acc_ref[...] += jnp.sum(x, axis=-1)

    @pl.when(k == pl.num_programs(1) - 1)
    def _():
        o_ref[...] = (acc_ref[...] * inv_hw).astype(o_ref.dtype)


def _gap_vmem_plan():
    """Per-generation (budget_for_double_buffered_input, vmem_limit) in bytes."""
    phys = 64 << 20                                  # conservative: v7x per-TC
    try:
        info = pltpu.get_tpu_info()
        phys = int(getattr(info, "vmem_capacity_bytes", phys))
    except Exception:
        pass
    # ~40% of physical VMEM for the double-buffered GAP input, capped at 48 MiB
    # (v5e/v6e: 128 MiB -> 48 MiB; v7x: 64 MiB -> ~25 MiB).
    budget = min(48 << 20, (phys * 2) // 5)
    limit = min(phys - (8 << 20), budget + (16 << 20))
    return budget, limit


def _pick_gap_tiling(n, c, hw, itemsize, budget):
    """Return (tn, thw); thw == hw means no spatial reduction split."""
    # Padded VMEM footprint of one N row of the (TN, C, HW) block: HW maps to
    # the 128-lane axis and C to the 8-sublane axis.
    c_pad = _round_up(c, _SUBLANE)
    hw_pad = _round_up(hw, _LANE)
    row_bytes = c_pad * hw_pad * itemsize
    tn = budget // (2 * row_bytes)                   # double-buffered input

    if tn >= n:
        # Whole N fits; still keep >= 2 grid steps so the parallel axis can be
        # split across TensorCores (v7x megacore). Harmless elsewhere.
        if n > _SUBLANE:
            tn = min(n, max(_SUBLANE, _round_up(_cdiv(n, 2), _SUBLANE)))
        else:
            tn = n
        return tn, hw

    if tn >= _SUBLANE:
        return (tn // _SUBLANE) * _SUBLANE, hw

    # Even 8 rows of the full (C, HW) map exceed the budget: split the spatial
    # axis into a reduction grid axis.
    tn = min(_SUBLANE, n)
    thw = budget // (2 * tn * c_pad * itemsize)
    thw = max(_LANE, (thw // _LANE) * _LANE)
    if thw >= hw:
        return tn, hw
    return tn, thw


def global_avg_pool(x, *, vmem_budget_bytes=None):
    # x: [N, C, H, W] -> [N, C]
    n, c, h, w = x.shape
    hw = h * w
    x3 = x.reshape(n, c, hw)

    budget, limit = _gap_vmem_plan()
    if vmem_budget_bytes is not None:
        budget = vmem_budget_bytes
    tn, thw = _pick_gap_tiling(n, c, hw, x.dtype.itemsize, budget)

    if thw == hw:
        kern = functools.partial(_gap_kernel, inv_hw=1.0 / float(hw))
        return pl.pallas_call(
            kern,
            out_shape=jax.ShapeDtypeStruct((n, c), x.dtype),
            grid=(_cdiv(n, tn),),
            in_specs=[pl.BlockSpec((tn, c, hw), lambda i: (i, 0, 0))],
            out_specs=pl.BlockSpec((tn, c), lambda i: (i, 0)),
            compiler_params=pltpu.CompilerParams(
                dimension_semantics=("parallel",),
                vmem_limit_bytes=limit),
        )(x3)

    # Spatial-split path: second "arbitrary" grid axis reduces HW chunks into
    # a resident f32 accumulator (output block index ignores k).
    kern = functools.partial(
        _gap_reduce_kernel,
        inv_hw=1.0 / float(hw),
        hw_total=hw,
        thw=thw,
        need_mask=(hw % thw != 0),
    )
    return pl.pallas_call(
        kern,
        out_shape=jax.ShapeDtypeStruct((n, c), x.dtype),
        grid=(_cdiv(n, tn), _cdiv(hw, thw)),
        in_specs=[pl.BlockSpec((tn, c, thw), lambda i, k: (i, 0, k))],
        out_specs=pl.BlockSpec((tn, c), lambda i, k: (i, 0)),
        scratch_shapes=[pltpu.VMEM((tn, c), jnp.float32)],
        compiler_params=pltpu.CompilerParams(
            dimension_semantics=("parallel", "arbitrary"),
            vmem_limit_bytes=limit),
    )(x3)


# ---------------------------------------------------------------------------
# Kernel 2: prototype mean over shots + (-||proto - query||^2 / temperature)
#           for the whole task batch in ONE invocation (batched einsum on MXU)
# ---------------------------------------------------------------------------
def _proto_dist_kernel(sup_ref, qry_ref, out_ref, *, inv_shot, inv_temp):
    # sup_ref: (B, S, W, C)  support features
    # qry_ref: (B, Q, C)     Q = n_query * way flattened queries
    # out_ref: (B, W, Q)     transposed logits (Q lane-dense)
    sup = sup_ref[...].astype(jnp.float32)
    proto = jnp.sum(sup, axis=1) * inv_shot                       # (B, W, C)
    q = qry_ref[...].astype(jnp.float32)                          # (B, Q, C)
    gram = jnp.einsum('bwc,bqc->bwq', proto, q,
                      preferred_element_type=jnp.float32)         # (B, W, Q)
    p2 = jnp.sum(proto * proto, axis=-1)[:, :, None]              # (B, W, 1)
    q2 = jnp.sum(q * q, axis=-1)[:, None, :]                      # (B, 1, Q)
    out_ref[...] = (2.0 * gram - p2 - q2) * inv_temp


def proto_logits(support, query_flat, temperature):
    # support:    [B, shot, way, C]
    # query_flat: [B, Q, C] with Q = n_query * way (row-major flatten)
    b, s, w, c = support.shape
    q = query_flat.shape[1]
    kern = functools.partial(
        _proto_dist_kernel,
        inv_shot=1.0 / float(s),
        inv_temp=1.0 / float(temperature),
    )
    # Single grid step: per-batch work is tiny and latency-bound; everything
    # fits comfortably in VMEM on every generation.
    out_t = pl.pallas_call(
        kern,
        out_shape=jax.ShapeDtypeStruct((b, w, q), jnp.float32),
    )(support, query_flat)
    # (B, W, Q) -> (B, Q, W) -> (B*Q, W); tiny transpose handled in JAX glue.
    return jnp.transpose(out_t, (0, 2, 1)).reshape(b * q, w)


# ---------------------------------------------------------------------------
# Full ProtoNet forward (glue in JAX, hot paths in Pallas)
# ---------------------------------------------------------------------------
def protonet_forward(instance_embs, support_idx, query_idx, temperature):
    features = global_avg_pool(instance_embs)                 # [N, C]
    emb_dim = features.shape[-1]
    # Row gather (data-dependent indexing) kept in plain JAX glue.
    # TODO(synk): fuse into kernel 2 via scalar-prefetched indices.
    support = features[support_idx.reshape(-1)].reshape(support_idx.shape + (emb_dim,))
    query = features[query_idx.reshape(-1)].reshape(query_idx.shape + (emb_dim,))
    num_batch = support.shape[0]
    num_query = query_idx.shape[-2] * query_idx.shape[-1]
    query_flat = query.reshape(num_batch, num_query, emb_dim)
    logits = proto_logits(support, query_flat, temperature)   # [B*num_query, way]
    return logits


# ---------------------------------------------------------------------------
# Pure-JAX reference of the PyTorch forward, for correctness checking
# ---------------------------------------------------------------------------
def protonet_ref(instance_embs, support_idx, query_idx, temperature):
    features = jnp.mean(instance_embs, axis=(2, 3))
    emb = features.shape[-1]
    support = features[support_idx.reshape(-1)].reshape(support_idx.shape + (emb,))
    query = features[query_idx.reshape(-1)].reshape(query_idx.shape + (emb,))
    proto = support.mean(axis=1)                              # [B, way, C]
    B, way, _ = proto.shape
    nq = query_idx.shape[-2] * query_idx.shape[-1]
    qf = query.reshape(B * nq, 1, emb)
    pf = jnp.broadcast_to(proto[:, None], (B, nq, way, emb)).reshape(B * nq, way, emb)
    return -jnp.sum((pf - qf) ** 2, axis=2) / temperature


if __name__ == "__main__":
    key = jax.random.PRNGKey(0)

    # small few-shot task: 2 task batches, 4-way, 2-shot, 3 queries per class
    B, way, shot, n_query = 2, 4, 2, 3
    C, H, W = 32, 8, 8
    N = B * (shot + n_query) * way
    temperature = 64.0

    instance_embs = jax.random.normal(key, (N, C, H, W), dtype=jnp.float32)

    idx = np.arange(N, dtype=np.int32).reshape(B, shot + n_query, way)
    support_idx = jnp.asarray(idx[:, :shot, :])               # [B, shot, way]
    query_idx = jnp.asarray(idx[:, shot:, :])                 # [B, n_query, way]

    logits = protonet_forward(instance_embs, support_idx, query_idx, temperature)
    logits = jax.block_until_ready(logits)

    ref = protonet_ref(instance_embs, support_idx, query_idx, temperature)
    np.testing.assert_allclose(np.asarray(logits), np.asarray(ref),
                               rtol=1e-4, atol=1e-4)

    # Also exercise the spatial-split (reduction-axis) GAP path by forcing a
    # tiny VMEM budget on a feature map with a ragged last HW chunk.
    x_big = jax.random.normal(jax.random.PRNGKey(1), (16, 64, 16, 20),
                              dtype=jnp.float32)
    gap_split = jax.block_until_ready(
        global_avg_pool(x_big, vmem_budget_bytes=512 * 1024))
    np.testing.assert_allclose(np.asarray(gap_split),
                               np.asarray(jnp.mean(x_big, axis=(2, 3))),
                               rtol=1e-5, atol=1e-5)

    print("KERNEL_OK")
</pallas_src>

<mosaic_0001>
module attributes {stable_mosaic.version = 11 : i64} {
  func.func @_gap_kernel(%arg0: i32, %arg1: memref<24x32x64xf32, #tpu.memory_space<vmem>>, %arg2: memref<24x32xf32, #tpu.memory_space<vmem>>) attributes {dimension_semantics = [#tpu.dimension_semantics<parallel>], iteration_bounds = array<i64: 2>, scalar_prefetch = 0 : i64, scratch_operands = 0 : i64, tpu.core_type = #tpu.core_type<tc>, window_params = [{transform_indices = @transform_0, window_bounds = array<i64: 24, 32, 64>}, {transform_indices = @transform_1, window_bounds = array<i64: 24, 32>}]} {
    %c0 = arith.constant 0 : index
    %c0_0 = arith.constant 0 : index
    %c0_1 = arith.constant 0 : index
    %0 = vector.load %arg1[%c0, %c0_0, %c0_1] : memref<24x32x64xf32, #tpu.memory_space<vmem>>, vector<24x32x64xf32>
    %cst = arith.constant dense<0.000000e+00> : vector<24x32xf32>
    %1 = vector.multi_reduction <add>, %0, %cst [2] : vector<24x32x64xf32> to vector<24x32xf32>
    %cst_2 = arith.constant 1.562500e-02 : f32
    %2 = vector.broadcast %cst_2 : f32 to vector<24x32xf32>
    %3 = arith.mulf %1, %2 : vector<24x32xf32>
    %c0_3 = arith.constant 0 : index
    %c0_4 = arith.constant 0 : index
    %4 = vector.load %arg2[%c0_3, %c0_4] : memref<24x32xf32, #tpu.memory_space<vmem>>, vector<24x32xf32>
    tpu.vector_store %arg2[%c0_3, %c0_4], %3 {strides = array<i32>} : memref<24x32xf32, #tpu.memory_space<vmem>>, vector<24x32xf32>,
    return
  }
  func.func @transform_0(%arg0: i32) -> (i32, i32, i32) {
    %c0_i32 = arith.constant 0 : i32
    %c0_i32_0 = arith.constant 0 : i32
    %c0_i32_1 = arith.constant 0 : i32
    return %arg0, %c0_i32, %c0_i32_0 : i32, i32, i32
  }
  func.func @transform_1(%arg0: i32) -> (i32, i32) {
    %c0_i32 = arith.constant 0 : i32
    %c0_i32_0 = arith.constant 0 : i32
    return %arg0, %c0_i32 : i32, i32
  }
}

</mosaic_0001>

<llo_original>
// kernel: tpu_custom_call.1
$region0: #{tpu_custom_call.1}
  #allocation0 [shape = 'u32[]', space=smem, size = 0x4, offset = 0x4, fixed_abs, tag = 'smem constant byte address 0x4 - core index']
  #allocation1 [shape = 'u32[72,128]{1,0:T(1,128)}', space=vmem, size = 0x9000, scoped, tag = 'internal scratch']
  %s0 = inlined_call_operand.hbm [shape: f32[40,32,64], index: 0, kind: input, shape index: {}]
  %s1 = inlined_call_operand.vmem [shape: f32[40,32], index: 1, kind: output, shape index: {}]
  %s2 = sld [smem:[#allocation0]]
  $region89: #{tpu_custom_call.1} parent=0
    _
  %s4 = ssub.s32 1, %s2
  %s5 = scalar_select 0, %s4, %s2
  $region1: #{tpu_custom_call.1} parent=0
    #allocation2 [shape = 'u8[786432]{0}', space=vmem, size = 0xc0000, scoped, tag = 'input window, operand 0']
    #allocation3 [shape = 's32[2]{0}', space=sflag, size = 0x8, scoped, tag = 'scoped memory for tpu_custom_call.1']
    #allocation4 [shape = 'u8[24576]{0}', space=vmem, size = 0x6000, scoped, tag = 'output window, operand 0']
    %6 = vsyncpa [#allocation3], 0
    %s7 = scalar_lea.sflag [#allocation3], 1
    %8 = vsyncpa %s7, 0
    loop: start=0, step=1, limit=4
    $region2: #{tpu_custom_call.1} parent=1 // loop_pre_header
      _
    $region3: #{tpu_custom_call.1} parent=1 // loop_header
      %s10 = sphi 0, %s14
      %p11 = scmp.ge.s32.totalorder %s10, 4
      %s20 = sphi 0, %s22
      %s23 = sphi 0, %s20
      %s24 = sphi 0, %s23
      %s40 = sphi 0, %s24
      %s46 = sphi 0, %s48
      %s49 = sphi 0, %s46
      %s50 = sphi 0, %s49
      %s66 = sphi 0, %s50
    $region4: #{tpu_custom_call.1} parent=1 // loop_header_branch
      %13 = sbr.rel (%p11) target = $region8
    $region5: #{tpu_custom_call.1} parent=1 // loop_body
      %s15 = ssub.s32 %s10, 1
      %s16 = ssub.s32 %s10, 2
      %s17 = sadd.s32 %s10, 1
      %s18 = ssub.s32 %s10, %s17
      %p19 = scmp.eq.s32.totalorder %s18, 0
      %s21 = sadd.s32 %s20, 1
      %s22 = scalar_select %p19, %s20, %s21
      %p25 = pneg %p19
      %p26 = scmp.eq.s32.totalorder %s10, 1
      %p27 = por %p25, %p26
      %p28 = scmp.ne.s32.totalorder %s20, %s23
      %p29 = scmp.eq.s32.totalorder %s10, 0
      %p30 = por %p28, %p29
      %p31 = scmp.ne.s32.totalorder %s20, %s23
      %p32 = scmp.eq.s32.totalorder %s15, 1
      %p33 = por %p31, %p32
      %p34 = scmp.ne.s32.totalorder %s23, %s24
      %p35 = scmp.eq.s32.totalorder %s15, 0
      %p36 = por %p34, %p35
      %p37 = scmp.ne.s32.totalorder %s23, %s24
      %p38 = scmp.eq.s32.totalorder %s16, 1
      %p39 = por %p37, %p38
      %p41 = scmp.ne.s32.totalorder %s24, %s40
      %p42 = scmp.eq.s32.totalorder %s16, 0
      %p43 = por %p41, %p42
      %s44 = ssub.s32 %s10, %s17
      %p45 = scmp.eq.s32.totalorder %s44, 0
      %s47 = sadd.s32 %s46, 1
      %s48 = scalar_select %p45, %s46, %s47
      %p51 = pneg %p45
      %p52 = scmp.eq.s32.totalorder %s10, 1
      %p53 = por %p51, %p52
      %p54 = scmp.ne.s32.totalorder %s46, %s49
      %p55 = scmp.eq.s32.totalorder %s10, 0
      %p56 = por %p54, %p55
      %p57 = scmp.ne.s32.totalorder %s46, %s49
      %p58 = scmp.eq.s32.totalorder %s15, 1
      %p59 = por %p57, %p58
      %p60 = scmp.ne.s32.totalorder %s49, %s50
      %p61 = scmp.eq.s32.totalorder %s15, 0
      %p62 = por %p60, %p61
      %p63 = scmp.ne.s32.totalorder %s49, %s50
      %p64 = scmp.eq.s32.totalorder %s16, 1
      %p65 = por %p63, %p64
      %p67 = scmp.ne.s32.totalorder %s50, %s66
      %p68 = scmp.eq.s32.totalorder %s16, 0
      %p69 = por %p67, %p68
      %p70 = scmp.le.s32.totalorder 1, %s10
      %p71 = scmp.lt.s32.totalorder %s10, 3
      %p72 = pnand %p70, %p71
      %p73 = pneg %p72
      // Predicated region
      $region9: #{tpu_custom_call.1} parent=5 // pred_check
        _
      $region10: #{tpu_custom_call.1} parent=5 // pred_check_branch
        %75 = sbr.rel (%p72) target = $region12
      $region11: #{tpu_custom_call.1} parent=5 // pred_region
        %s76 = ssub.s32 %s10, 1
      $region12: #{tpu_custom_call.1} parent=5 // pred_fallthru
        _
      %p77 = scmp.lt.s32.totalorder %s10, 2
      // Predicated region
      $region13: #{tpu_custom_call.1} parent=5 // pred_check
        %p78 = pneg %p77
      $region14: #{tpu_custom_call.1} parent=5 // pred_check_branch
        %80 = sbr.rel (%p78) target = $region16
      $region15: #{tpu_custom_call.1} parent=5 // pred_region
        // Predicated region
        $region17: #{tpu_custom_call.1} parent=15 // pred_check
          %p81 = pneg %p30
        $region18: #{tpu_custom_call.1} parent=15 // pred_check_branch
          %83 = sbr.rel (%p81) target = $region20
        $region19: #{tpu_custom_call.1} parent=15 // pred_region
          %s84 = sand.u32 %s20, 1
          %s85 = scalar_lea.sflag [#allocation3], %s84
          %s86 = sand.u32 %s20, 1
          %s87 = smul.addr %s86, 768
          %s88 = scalar_lea.vmem [#allocation2], %s87
          %s89 = smul.u32 24, %s10
          %s90 = ssub.s32 40, %s89
          %p91 = scmp.lt.s32.totalorder %s90, 24
          %s92 = scalar_select %p91, %s90, 24
          %s93 = smul.u32 8, %s92
          %s94 = smul.u32 %s93, 4
          %s95 = ssub.s32 768, %s94
          %s96 = sshll.u32 %s95, 4
          %97 = vsyncadd %s85, %s96
          %p98 = scmp.ne.s32.totalorder 0, %s94
          %s99 = smul.addr %s89, 4
          %s100 = smul.addr %s99, 8
          %s101 = scalar_lea.hbm %s0, %s100
          %s102 = smul.u32 %s92, 4
          %s103 = smul.u32 8, %s102
          %s104 = sshll.u32 %s101, 4
          %s105 = int_to_ptr.hbm [resolvable:$true] %s104
          %s106 = sshll.u32 %s88, 4
          %s107 = int_to_ptr.vmem [resolvable:$true] %s106
          %s108 = sshll.u32 %s103, 4
          %112 = dma.hbm_to_vmem [thread:$0]  (%p98), %s105, %s108, %s107, %s85, 128, 128, 8
        $region20: #{tpu_custom_call.1} parent=15 // pred_fallthru
          _
      $region16: #{tpu_custom_call.1} parent=5 // pred_fallthru
        _
      %p113 = scmp.le.s32.totalorder 1, %s10
      %p114 = scmp.lt.s32.totalorder %s10, 3
      %p115 = pnand %p113, %p114
      %p116 = pneg %p115
      // Predicated region
      $region21: #{tpu_custom_call.1} parent=5 // pred_check
        _
      $region22: #{tpu_custom_call.1} parent=5 // pred_check_branch
        %118 = sbr.rel (%p115) target = $region24
      $region23: #{tpu_custom_call.1} parent=5 // pred_region
        %s119 = ssub.s32 %s10, 1
        %s120 = sand.u32 %s23, 1
        %s121 = scalar_lea.sflag [#allocation3], %s120
        %s122 = sand.u32 %s23, 1
        %s123 = smul.addr %s122, 768
        %s124 = scalar_lea.vmem [#allocation2], %s123
        // Predicated region
        $region25: #{tpu_custom_call.1} parent=23 // pred_check
          %p125 = pneg %p36
        $region26: #{tpu_custom_call.1} parent=23 // pred_check_branch
          %127 = sbr.rel (%p125) target = $region28
        $region27: #{tpu_custom_call.1} parent=23 // pred_region
          %129 = dma.done %s121, 12288
        $region28: #{tpu_custom_call.1} parent=23 // pred_fallthru
          _
        %s130 = sand.u32 %s23, 1
        %s131 = scalar_lea.sflag [#allocation3], %s130
        %s132 = sand.u32 %s23, 1
        %s133 = smul.addr %s132, 768
        %s134 = scalar_lea.vmem [#allocation2], %s133
        %p135 = pneg %p36
        %p136 = pneg %p33
        %p137 = pneg %p62
        %p138 = pneg %p59
        %s139 = sand.u32 %s49, 1
        %s140 = sand.u32 %s49, 1
        %s141 = smul.addr %s140, 24
        %s142 = scalar_lea.vmem [#allocation4], %s141
        %s143 = smul.u32 24, %s15
        %s144 = ssub.s32 40, %s143
        %p145 = scmp.lt.s32.totalorder %s144, 24
        %s146 = scalar_select %p145, %s144, 24
        %s147 = smul.u32 8, %s146
        %s148 = smul.u32 %s147, 4
        %s149 = smul.u32 3, %s15
        %s150 = ssub.s32 5, %s149
        %p151 = scmp.lt.s32.totalorder %s150, 3
        %s152 = scalar_select %p151, %s150, 3
        %s153 = smul.u32 8, %s152
        %v154 = vld [vmem:[%s124] sm:$0xff]
        %v155 = vld [vmem:[%s124 + $0x8] sm:$0xff]
        %v156 = vld [vmem:[%s124 + $0x10] sm:$0xff]
        %v157 = vld [vmem:[%s124 + $0x18] sm:$0xff]
        %v158 = vld [vmem:[%s124 + $0x20] sm:$0xff]
        %v159 = vld [vmem:[%s124 + $0x28] sm:$0xff]
        %v160 = vld [vmem:[%s124 + $0x30] sm:$0xff]
        %v161 = vld [vmem:[%s124 + $0x38] sm:$0xff]
        %v162 = vld [vmem:[%s124 + $0x40] sm:$0xff]
        %v163 = vld [vmem:[%s124 + $0x48] sm:$0xff]
        %v164 = vld [vmem:[%s124 + $0x50] sm:$0xff]
        %v165 = vld [vmem:[%s124 + $0x58] sm:$0xff]
        %v166 = vld [vmem:[%s124 + $0x60] sm:$0xff]
        %v167 = vld [vmem:[%s124 + $0x68] sm:$0xff]
        %v168 = vld [vmem:[%s124 + $0x70] sm:$0xff]
        %v169 = vld [vmem:[%s124 + $0x78] sm:$0xff]
        %v170 = vld [vmem:[%s124 + $0x80] sm:$0xff]
        %v171 = vld [vmem:[%s124 + $0x88] sm:$0xff]
        %v172 = vld [vmem:[%s124 + $0x90] sm:$0xff]
        %v173 = vld [vmem:[%s124 + $0x98] sm:$0xff]
        %v174 = vld [vmem:[%s124 + $0xa0] sm:$0xff]
        %v175 = vld [vmem:[%s124 + $0xa8] sm:$0xff]
        %v176 = vld [vmem:[%s124 + $0xb0] sm:$0xff]
        %v177 = vld [vmem:[%s124 + $0xb8] sm:$0xff]
        %v178 = vld [vmem:[%s124 + $0xc0] sm:$0xff]
        %v179 = vld [vmem:[%s124 + $0xc8] sm:$0xff]
        %v180 = vld [vmem:[%s124 + $0xd0] sm:$0xff]
        %v181 = vld [vmem:[%s124 + $0xd8] sm:$0xff]
        %v182 = vld [vmem:[%s124 + $0xe0] sm:$0xff]
        %v183 = vld [vmem:[%s124 + $0xe8] sm:$0xff]
        %v184 = vld [vmem:[%s124 + $0xf0] sm:$0xff]
        %v185 = vld [vmem:[%s124 + $0xf8] sm:$0xff]
        %v186 = vld [vmem:[%s124 + $0x100] sm:$0xff]
        %v187 = vld [vmem:[%s124 + $0x108] sm:$0xff]
        %v188 = vld [vmem:[%s124 + $0x110] sm:$0xff]
        %v189 = vld [vmem:[%s124 + $0x118] sm:$0xff]
        %v190 = vld [vmem:[%s124 + $0x120] sm:$0xff]
        %v191 = vld [vmem:[%s124 + $0x128] sm:$0xff]
        %v192 = vld [vmem:[%s124 + $0x130] sm:$0xff]
        %v193 = vld [vmem:[%s124 + $0x138] sm:$0xff]
        %v194 = vld [vmem:[%s124 + $0x140] sm:$0xff]
        %v195 = vld [vmem:[%s124 + $0x148] sm:$0xff]
        %v196 = vld [vmem:[%s124 + $0x150] sm:$0xff]
        %v197 = vld [vmem:[%s124 + $0x158] sm:$0xff]
        %v198 = vld [vmem:[%s124 + $0x160] sm:$0xff]
        %v199 = vld [vmem:[%s124 + $0x168] sm:$0xff]
        %v200 = vld [vmem:[%s124 + $0x170] sm:$0xff]
        %v201 = vld [vmem:[%s124 + $0x178] sm:$0xff]
        %v202 = vld [vmem:[%s124 + $0x180] sm:$0xff]
        %v203 = vld [vmem:[%s124 + $0x188] sm:$0xff]
        %v204 = vld [vmem:[%s124 + $0x190] sm:$0xff]
        %v205 = vld [vmem:[%s124 + $0x198] sm:$0xff]
        %v206 = vld [vmem:[%s124 + $0x1a0] sm:$0xff]
        %v207 = vld [vmem:[%s124 + $0x1a8] sm:$0xff]
        %v208 = vld [vmem:[%s124 + $0x1b0] sm:$0xff]
        %v209 = vld [vmem:[%s124 + $0x1b8] sm:$0xff]
        %v210 = vld [vmem:[%s124 + $0x1c0] sm:$0xff]
        %v211 = vld [vmem:[%s124 + $0x1c8] sm:$0xff]
        %v212 = vld [vmem:[%s124 + $0x1d0] sm:$0xff]
        %v213 = vld [vmem:[%s124 + $0x1d8] sm:$0xff]
        %v214 = vld [vmem:[%s124 + $0x1e0] sm:$0xff]
        %v215 = vld [vmem:[%s124 + $0x1e8] sm:$0xff]
        %v216 = vld [vmem:[%s124 + $0x1f0] sm:$0xff]
        %v217 = vld [vmem:[%s124 + $0x1f8] sm:$0xff]
        %v218 = vld [vmem:[%s124 + $0x200] sm:$0xff]
        %v219 = vld [vmem:[%s124 + $0x208] sm:$0xff]
        %v220 = vld [vmem:[%s124 + $0x210] sm:$0xff]
        %v221 = vld [vmem:[%s124 + $0x218] sm:$0xff]
        %v222 = vld [vmem:[%s124 + $0x220] sm:$0xff]
        %v223 = vld [vmem:[%s124 + $0x228] sm:$0xff]
        %v224 = vld [vmem:[%s124 + $0x230] sm:$0xff]
        %v225 = vld [vmem:[%s124 + $0x238] sm:$0xff]
        %v226 = vld [vmem:[%s124 + $0x240] sm:$0xff]
        %v227 = vld [vmem:[%s124 + $0x248] sm:$0xff]
        %v228 = vld [vmem:[%s124 + $0x250] sm:$0xff]
        %v229 = vld [vmem:[%s124 + $0x258] sm:$0xff]
        %v230 = vld [vmem:[%s124 + $0x260] sm:$0xff]
        %v231 = vld [vmem:[%s124 + $0x268] sm:$0xff]
        %v232 = vld [vmem:[%s124 + $0x270] sm:$0xff]
        %v233 = vld [vmem:[%s124 + $0x278] sm:$0xff]
        %v234 = vld [vmem:[%s124 + $0x280] sm:$0xff]
        %v235 = vld [vmem:[%s124 + $0x288] sm:$0xff]
        %v236 = vld [vmem:[%s124 + $0x290] sm:$0xff]
        %v237 = vld [vmem:[%s124 + $0x298] sm:$0xff]
        %v238 = vld [vmem:[%s124 + $0x2a0] sm:$0xff]
        %v239 = vld [vmem:[%s124 + $0x2a8] sm:$0xff]
        %v240 = vld [vmem:[%s124 + $0x2b0] sm:$0xff]
        %v241 = vld [vmem:[%s124 + $0x2b8] sm:$0xff]
        %v242 = vld [vmem:[%s124 + $0x2c0] sm:$0xff]
        %v243 = vld [vmem:[%s124 + $0x2c8] sm:$0xff]
        %v244 = vld [vmem:[%s124 + $0x2d0] sm:$0xff]
        %v245 = vld [vmem:[%s124 + $0x2d8] sm:$0xff]
        %v246 = vld [vmem:[%s124 + $0x2e0] sm:$0xff]
        %v247 = vld [vmem:[%s124 + $0x2e8] sm:$0xff]
        %v248 = vld [vmem:[%s124 + $0x2f0] sm:$0xff]
        %v249 = vld [vmem:[%s124 + $0x2f8] sm:$0xff]
        %vm250 = vcmask 523264
        %v251 = vsel %vm250, %v154, 0.0
        %252 = vadd.xlane.f32.xlu0 %v251
        %v253 = vpop.xlane.xlu0 %252
        %v254 = vsel %vm250, %v155, 0.0
        %255 = vadd.xlane.f32.xlu0 %v254
        %v256 = vpop.xlane.xlu0 %255
        %v257 = vsel %vm250, %v156, 0.0
        %258 = vadd.xlane.f32.xlu0 %v257
        %v259 = vpop.xlane.xlu0 %258
        %v260 = vsel %vm250, %v157, 0.0
        %261 = vadd.xlane.f32.xlu0 %v260
        %v262 = vpop.xlane.xlu0 %261
        %v263 = vsel %vm250, %v158, 0.0
        %264 = vadd.xlane.f32.xlu0 %v263
        %v265 = vpop.xlane.xlu0 %264
        %v266 = vsel %vm250, %v159, 0.0
        %267 = vadd.xlane.f32.xlu0 %v266
        %v268 = vpop.xlane.xlu0 %267
        %v269 = vsel %vm250, %v160, 0.0
        %270 = vadd.xlane.f32.xlu0 %v269
        %v271 = vpop.xlane.xlu0 %270
        %v272 = vsel %vm250, %v161, 0.0
        %273 = vadd.xlane.f32.xlu0 %v272
        %v274 = vpop.xlane.xlu0 %273
        %v275 = vsel %vm250, %v162, 0.0
        %276 = vadd.xlane.f32.xlu0 %v275
        %v277 = vpop.xlane.xlu0 %276
        %v278 = vsel %vm250, %v163, 0.0
        %279 = vadd.xlane.f32.xlu0 %v278
        %v280 = vpop.xlane.xlu0 %279
        %v281 = vsel %vm250, %v164, 0.0
        %282 = vadd.xlane.f32.xlu0 %v281
        %v283 = vpop.xlane.xlu0 %282
        %v284 = vsel %vm250, %v165, 0.0
        %285 = vadd.xlane.f32.xlu0 %v284
        %v286 = vpop.xlane.xlu0 %285
        %v287 = vsel %vm250, %v166, 0.0
        %288 = vadd.xlane.f32.xlu0 %v287
        %v289 = vpop.xlane.xlu0 %288
        %v290 = vsel %vm250, %v167, 0.0
        %291 = vadd.xlane.f32.xlu0 %v290
        %v292 = vpop.xlane.xlu0 %291
        %v293 = vsel %vm250, %v168, 0.0
        %294 = vadd.xlane.f32.xlu0 %v293
        %v295 = vpop.xlane.xlu0 %294
        %v296 = vsel %vm250, %v169, 0.0
        %297 = vadd.xlane.f32.xlu0 %v296
        %v298 = vpop.xlane.xlu0 %297
        %v299 = vsel %vm250, %v170, 0.0
        %300 = vadd.xlane.f32.xlu0 %v299
        %v301 = vpop.xlane.xlu0 %300
        %v302 = vsel %vm250, %v171, 0.0
        %303 = vadd.xlane.f32.xlu0 %v302
        %v304 = vpop.xlane.xlu0 %303
        %v305 = vsel %vm250, %v172, 0.0
        %306 = vadd.xlane.f32.xlu0 %v305
        %v307 = vpop.xlane.xlu0 %306
        %v308 = vsel %vm250, %v173, 0.0
        %309 = vadd.xlane.f32.xlu0 %v308
        %v310 = vpop.xlane.xlu0 %309
        %v311 = vsel %vm250, %v174, 0.0
        %312 = vadd.xlane.f32.xlu0 %v311
        %v313 = vpop.xlane.xlu0 %312
        %v314 = vsel %vm250, %v175, 0.0
        %315 = vadd.xlane.f32.xlu0 %v314
        %v316 = vpop.xlane.xlu0 %315
        %v317 = vsel %vm250, %v176, 0.0
        %318 = vadd.xlane.f32.xlu0 %v317
        %v319 = vpop.xlane.xlu0 %318
        %v320 = vsel %vm250, %v177, 0.0
        %321 = vadd.xlane.f32.xlu0 %v320
        %v322 = vpop.xlane.xlu0 %321
        %v323 = vsel %vm250, %v178, 0.0
        %324 = vadd.xlane.f32.xlu0 %v323
        %v325 = vpop.xlane.xlu0 %324
        %v326 = vsel %vm250, %v179, 0.0
        %327 = vadd.xlane.f32.xlu0 %v326
        %v328 = vpop.xlane.xlu0 %327
        %v329 = vsel %vm250, %v180, 0.0
        %330 = vadd.xlane.f32.xlu0 %v329
        %v331 = vpop.xlane.xlu0 %330
        %v332 = vsel %vm250, %v181, 0.0
        %333 = vadd.xlane.f32.xlu0 %v332
        %v334 = vpop.xlane.xlu0 %333
        %v335 = vsel %vm250, %v182, 0.0
        %336 = vadd.xlane.f32.xlu0 %v335
        %v337 = vpop.xlane.xlu0 %336
        %v338 = vsel %vm250, %v183, 0.0
        %339 = vadd.xlane.f32.xlu0 %v338
        %v340 = vpop.xlane.xlu0 %339
        %v341 = vsel %vm250, %v184, 0.0
        %342 = vadd.xlane.f32.xlu0 %v341
        %v343 = vpop.xlane.xlu0 %342
        %v344 = vsel %vm250, %v185, 0.0
        %345 = vadd.xlane.f32.xlu0 %v344
        %v346 = vpop.xlane.xlu0 %345
        %v347 = vsel %vm250, %v186, 0.0
        %348 = vadd.xlane.f32.xlu0 %v347
        %v349 = vpop.xlane.xlu0 %348
        %v350 = vsel %vm250, %v187, 0.0
        %351 = vadd.xlane.f32.xlu0 %v350
        %v352 = vpop.xlane.xlu0 %351
        %v353 = vsel %vm250, %v188, 0.0
        %354 = vadd.xlane.f32.xlu0 %v353
        %v355 = vpop.xlane.xlu0 %354
        %v356 = vsel %vm250, %v189, 0.0
        %357 = vadd.xlane.f32.xlu0 %v356
        %v358 = vpop.xlane.xlu0 %357
        %v359 = vsel %vm250, %v190, 0.0
        %360 = vadd.xlane.f32.xlu0 %v359
        %v361 = vpop.xlane.xlu0 %360
        %v362 = vsel %vm250, %v191, 0.0
        %363 = vadd.xlane.f32.xlu0 %v362
        %v364 = vpop.xlane.xlu0 %363
        %v365 = vsel %vm250, %v192, 0.0
        %366 = vadd.xlane.f32.xlu0 %v365
        %v367 = vpop.xlane.xlu0 %366
        %v368 = vsel %vm250, %v193, 0.0
        %369 = vadd.xlane.f32.xlu0 %v368
        %v370 = vpop.xlane.xlu0 %369
        %v371 = vsel %vm250, %v194, 0.0
        %372 = vadd.xlane.f32.xlu0 %v371
        %v373 = vpop.xlane.xlu0 %372
        %v374 = vsel %vm250, %v195, 0.0
        %375 = vadd.xlane.f32.xlu0 %v374
        %v376 = vpop.xlane.xlu0 %375
        %v377 = vsel %vm250, %v196, 0.0
        %378 = vadd.xlane.f32.xlu0 %v377
        %v379 = vpop.xlane.xlu0 %378
        %v380 = vsel %vm250, %v197, 0.0
        %381 = vadd.xlane.f32.xlu0 %v380
        %v382 = vpop.xlane.xlu0 %381
        %v383 = vsel %vm250, %v198, 0.0
        %384 = vadd.xlane.f32.xlu0 %v383
        %v385 = vpop.xlane.xlu0 %384
        %v386 = vsel %vm250, %v199, 0.0
        %387 = vadd.xlane.f32.xlu0 %v386
        %v388 = vpop.xlane.xlu0 %387
        %v389 = vsel %vm250, %v200, 0.0
        %390 = vadd.xlane.f32.xlu0 %v389
        %v391 = vpop.xlane.xlu0 %390
        %v392 = vsel %vm250, %v201, 0.0
        %393 = vadd.xlane.f32.xlu0 %v392
        %v394 = vpop.xlane.xlu0 %393
        %v395 = vsel %vm250, %v202, 0.0
        %396 = vadd.xlane.f32.xlu0 %v395
        %v397 = vpop.xlane.xlu0 %396
        %v398 = vsel %vm250, %v203, 0.0
        %399 = vadd.xlane.f32.xlu0 %v398
        %v400 = vpop.xlane.xlu0 %399
        %v401 = vsel %vm250, %v204, 0.0
        %402 = vadd.xlane.f32.xlu0 %v401
        %v403 = vpop.xlane.xlu0 %402
        %v404 = vsel %vm250, %v205, 0.0
        %405 = vadd.xlane.f32.xlu0 %v404
        %v406 = vpop.xlane.xlu0 %405
        %v407 = vsel %vm250, %v206, 0.0
        %408 = vadd.xlane.f32.xlu0 %v407
        %v409 = vpop.xlane.xlu0 %408
        %v410 = vsel %vm250, %v207, 0.0
        %411 = vadd.xlane.f32.xlu0 %v410
        %v412 = vpop.xlane.xlu0 %411
        %v413 = vsel %vm250, %v208, 0.0
        %414 = vadd.xlane.f32.xlu0 %v413
        %v415 = vpop.xlane.xlu0 %414
        %v416 = vsel %vm250, %v209, 0.0
        %417 = vadd.xlane.f32.xlu0 %v416
        %v418 = vpop.xlane.xlu0 %417
        %v419 = vsel %vm250, %v210, 0.0
        %420 = vadd.xlane.f32.xlu0 %v419
        %v421 = vpop.xlane.xlu0 %420
        %v422 = vsel %vm250, %v211, 0.0
        %423 = vadd.xlane.f32.xlu0 %v422
        %v424 = vpop.xlane.xlu0 %423
        %v425 = vsel %vm250, %v212, 0.0
        %426 = vadd.xlane.f32.xlu0 %v425
        %v427 = vpop.xlane.xlu0 %426
        %v428 = vsel %vm250, %v213, 0.0
        %429 = vadd.xlane.f32.xlu0 %v428
        %v430 = vpop.xlane.xlu0 %429
        %v431 = vsel %vm250, %v214, 0.0
        %432 = vadd.xlane.f32.xlu0 %v431
        %v433 = vpop.xlane.xlu0 %432
        %v434 = vsel %vm250, %v215, 0.0
        %435 = vadd.xlane.f32.xlu0 %v434
        %v436 = vpop.xlane.xlu0 %435
        %v437 = vsel %vm250, %v216, 0.0
        %438 = vadd.xlane.f32.xlu0 %v437
        %v439 = vpop.xlane.xlu0 %438
        %v440 = vsel %vm250, %v217, 0.0
        %441 = vadd.xlane.f32.xlu0 %v440
        %v442 = vpop.xlane.xlu0 %441
        %v443 = vsel %vm250, %v218, 0.0
        %444 = vadd.xlane.f32.xlu0 %v443
        %v445 = vpop.xlane.xlu0 %444
        %v446 = vsel %vm250, %v219, 0.0
        %447 = vadd.xlane.f32.xlu0 %v446
        %v448 = vpop.xlane.xlu0 %447
        %v449 = vsel %vm250, %v220, 0.0
        %450 = vadd.xlane.f32.xlu0 %v449
        %v451 = vpop.xlane.xlu0 %450
        %v452 = vsel %vm250, %v221, 0.0
        %453 = vadd.xlane.f32.xlu0 %v452
        %v454 = vpop.xlane.xlu0 %453
        %v455 = vsel %vm250, %v222, 0.0
        %456 = vadd.xlane.f32.xlu0 %v455
        %v457 = vpop.xlane.xlu0 %456
        %v458 = vsel %vm250, %v223, 0.0
        %459 = vadd.xlane.f32.xlu0 %v458
        %v460 = vpop.xlane.xlu0 %459
        %v461 = vsel %vm250, %v224, 0.0
        %462 = vadd.xlane.f32.xlu0 %v461
        %v463 = vpop.xlane.xlu0 %462
        %v464 = vsel %vm250, %v225, 0.0
        %465 = vadd.xlane.f32.xlu0 %v464
        %v466 = vpop.xlane.xlu0 %465
        %v467 = vsel %vm250, %v226, 0.0
        %468 = vadd.xlane.f32.xlu0 %v467
        %v469 = vpop.xlane.xlu0 %468
        %v470 = vsel %vm250, %v227, 0.0
        %471 = vadd.xlane.f32.xlu0 %v470
        %v472 = vpop.xlane.xlu0 %471
        %v473 = vsel %vm250, %v228, 0.0
        %474 = vadd.xlane.f32.xlu0 %v473
        %v475 = vpop.xlane.xlu0 %474
        %v476 = vsel %vm250, %v229, 0.0
        %477 = vadd.xlane.f32.xlu0 %v476
        %v478 = vpop.xlane.xlu0 %477
        %v479 = vsel %vm250, %v230, 0.0
        %480 = vadd.xlane.f32.xlu0 %v479
        %v481 = vpop.xlane.xlu0 %480
        %v482 = vsel %vm250, %v231, 0.0
        %483 = vadd.xlane.f32.xlu0 %v482
        %v484 = vpop.xlane.xlu0 %483
        %v485 = vsel %vm250, %v232, 0.0
        %486 = vadd.xlane.f32.xlu0 %v485
        %v487 = vpop.xlane.xlu0 %486
        %v488 = vsel %vm250, %v233, 0.0
        %489 = vadd.xlane.f32.xlu0 %v488
        %v490 = vpop.xlane.xlu0 %489
        %v491 = vsel %vm250, %v234, 0.0
        %492 = vadd.xlane.f32.xlu0 %v491
        %v493 = vpop.xlane.xlu0 %492
        %v494 = vsel %vm250, %v235, 0.0
        %495 = vadd.xlane.f32.xlu0 %v494
        %v496 = vpop.xlane.xlu0 %495
        %v497 = vsel %vm250, %v236, 0.0
        %498 = vadd.xlane.f32.xlu0 %v497
        %v499 = vpop.xlane.xlu0 %498
        %v500 = vsel %vm250, %v237, 0.0
        %501 = vadd.xlane.f32.xlu0 %v500
        %v502 = vpop.xlane.xlu0 %501
        %v503 = vsel %vm250, %v238, 0.0
        %504 = vadd.xlane.f32.xlu0 %v503
        %v505 = vpop.xlane.xlu0 %504
        %v506 = vsel %vm250, %v239, 0.0
        %507 = vadd.xlane.f32.xlu0 %v506
        %v508 = vpop.xlane.xlu0 %507
        %v509 = vsel %vm250, %v240, 0.0
        %510 = vadd.xlane.f32.xlu0 %v509
        %v511 = vpop.xlane.xlu0 %510
        %v512 = vsel %vm250, %v241, 0.0
        %513 = vadd.xlane.f32.xlu0 %v512
        %v514 = vpop.xlane.xlu0 %513
        %v515 = vsel %vm250, %v242, 0.0
        %516 = vadd.xlane.f32.xlu0 %v515
        %v517 = vpop.xlane.xlu0 %516
        %v518 = vsel %vm250, %v243, 0.0
        %519 = vadd.xlane.f32.xlu0 %v518
        %v520 = vpop.xlane.xlu0 %519
        %v521 = vsel %vm250, %v244, 0.0
        %522 = vadd.xlane.f32.xlu0 %v521
        %v523 = vpop.xlane.xlu0 %522
        %v524 = vsel %vm250, %v245, 0.0
        %525 = vadd.xlane.f32.xlu0 %v524
        %v526 = vpop.xlane.xlu0 %525
        %v527 = vsel %vm250, %v246, 0.0
        %528 = vadd.xlane.f32.xlu0 %v527
        %v529 = vpop.xlane.xlu0 %528
        %v530 = vsel %vm250, %v247, 0.0
        %531 = vadd.xlane.f32.xlu0 %v530
        %v532 = vpop.xlane.xlu0 %531
        %v533 = vsel %vm250, %v248, 0.0
        %534 = vadd.xlane.f32.xlu0 %v533
        %v535 = vpop.xlane.xlu0 %534
        %v536 = vsel %vm250, %v249, 0.0
        %537 = vadd.xlane.f32.xlu0 %v536
        %v538 = vpop.xlane.xlu0 %537
        %v539 = vmul.f32 %v253, 0.015625
        %v540 = vmul.f32 %v256, 0.015625
        %v541 = vmul.f32 %v259, 0.015625
        %v542 = vmul.f32 %v262, 0.015625
        %v543 = vmul.f32 %v265, 0.015625
        %v544 = vmul.f32 %v268, 0.015625
        %v545 = vmul.f32 %v271, 0.015625
        %v546 = vmul.f32 %v274, 0.015625
        %v547 = vmul.f32 %v277, 0.015625
        %v548 = vmul.f32 %v280, 0.015625
        %v549 = vmul.f32 %v283, 0.015625
        %v550 = vmul.f32 %v286, 0.015625
        %v551 = vmul.f32 %v289, 0.015625
        %v552 = vmul.f32 %v292, 0.015625
        %v553 = vmul.f32 %v295, 0.015625
        %v554 = vmul.f32 %v298, 0.015625
        %v555 = vmul.f32 %v301, 0.015625
        %v556 = vmul.f32 %v304, 0.015625
        %v557 = vmul.f32 %v307, 0.015625
        %v558 = vmul.f32 %v310, 0.015625
        %v559 = vmul.f32 %v313, 0.015625
        %v560 = vmul.f32 %v316, 0.015625
        %v561 = vmul.f32 %v319, 0.015625
        %v562 = vmul.f32 %v322, 0.015625
        %v563 = vmul.f32 %v325, 0.015625
        %v564 = vmul.f32 %v328, 0.015625
        %v565 = vmul.f32 %v331, 0.015625
        %v566 = vmul.f32 %v334, 0.015625
        %v567 = vmul.f32 %v337, 0.015625
        %v568 = vmul.f32 %v340, 0.015625
        %v569 = vmul.f32 %v343, 0.015625
        %v570 = vmul.f32 %v346, 0.015625
        %v571 = vmul.f32 %v349, 0.015625
        %v572 = vmul.f32 %v352, 0.015625
        %v573 = vmul.f32 %v355, 0.015625
        %v574 = vmul.f32 %v358, 0.015625
        %v575 = vmul.f32 %v361, 0.015625
        %v576 = vmul.f32 %v364, 0.015625
        %v577 = vmul.f32 %v367, 0.015625
        %v578 = vmul.f32 %v370, 0.015625
        %v579 = vmul.f32 %v373, 0.015625
        %v580 = vmul.f32 %v376, 0.015625
        %v581 = vmul.f32 %v379, 0.015625
        %v582 = vmul.f32 %v382, 0.015625
        %v583 = vmul.f32 %v385, 0.015625
        %v584 = vmul.f32 %v388, 0.015625
        %v585 = vmul.f32 %v391, 0.015625
        %v586 = vmul.f32 %v394, 0.015625
        %v587 = vmul.f32 %v397, 0.015625
        %v588 = vmul.f32 %v400, 0.015625
        %v589 = vmul.f32 %v403, 0.015625
        %v590 = vmul.f32 %v406, 0.015625
        %v591 = vmul.f32 %v409, 0.015625
        %v592 = vmul.f32 %v412, 0.015625
        %v593 = vmul.f32 %v415, 0.015625
        %v594 = vmul.f32 %v418, 0.015625
        %v595 = vmul.f32 %v421, 0.015625
        %v596 = vmul.f32 %v424, 0.015625
        %v597 = vmul.f32 %v427, 0.015625
        %v598 = vmul.f32 %v430, 0.015625
        %v599 = vmul.f32 %v433, 0.015625
        %v600 = vmul.f32 %v436, 0.015625
        %v601 = vmul.f32 %v439, 0.015625
        %v602 = vmul.f32 %v442, 0.015625
        %v603 = vmul.f32 %v445, 0.015625
        %v604 = vmul.f32 %v448, 0.015625
        %v605 = vmul.f32 %v451, 0.015625
        %v606 = vmul.f32 %v454, 0.015625
        %v607 = vmul.f32 %v457, 0.015625
        %v608 = vmul.f32 %v460, 0.015625
        %v609 = vmul.f32 %v463, 0.015625
        %v610 = vmul.f32 %v466, 0.015625
        %v611 = vmul.f32 %v469, 0.015625
        %v612 = vmul.f32 %v472, 0.015625
        %v613 = vmul.f32 %v475, 0.015625
        %v614 = vmul.f32 %v478, 0.015625
        %v615 = vmul.f32 %v481, 0.015625
        %v616 = vmul.f32 %v484, 0.015625
        %v617 = vmul.f32 %v487, 0.015625
        %v618 = vmul.f32 %v490, 0.015625
        %v619 = vmul.f32 %v493, 0.015625
        %v620 = vmul.f32 %v496, 0.015625
        %v621 = vmul.f32 %v499, 0.015625
        %v622 = vmul.f32 %v502, 0.015625
        %v623 = vmul.f32 %v505, 0.015625
        %v624 = vmul.f32 %v508, 0.015625
        %v625 = vmul.f32 %v511, 0.015625
        %v626 = vmul.f32 %v514, 0.015625
        %v627 = vmul.f32 %v517, 0.015625
        %v628 = vmul.f32 %v520, 0.015625
        %v629 = vmul.f32 %v523, 0.015625
        %v630 = vmul.f32 %v526, 0.015625
        %v631 = vmul.f32 %v529, 0.015625
        %v632 = vmul.f32 %v532, 0.015625
        %v633 = vmul.f32 %v535, 0.015625
        %v634 = vmul.f32 %v538, 0.015625
        %v731 = vlaneseq
        %v732 = vand.u32 %v731, 127
        %v733 = vperm.slane %v539, %v732
        %v734 = vadd.s32 %v732, 4294967288
        %v735 = vperm.slane %v540, %v734
        %vm736 = vcmask 130112
        %v737 = vsel %vm736, %v735, %v733
        %v738 = vadd.s32 %v732, 4294967280
        %v739 = vperm.slane %v541, %v738
        %vm740 = vcmask 195712
        %v741 = vsel %vm740, %v739, %v737
        %v742 = vadd.s32 %v732, 4294967272
        %v743 = vperm.slane %v542, %v742
        %vm744 = vcmask 261312
        %v745 = vsel %vm744, %v743, %v741
        %v746 = vperm.slane %v543, %v732
        %v747 = vperm.slane %v544, %v734
        %v748 = vsel %vm736, %v747, %v746
        %v749 = vperm.slane %v545, %v738
        %v750 = vsel %vm740, %v749, %v748
        %v751 = vperm.slane %v546, %v742
        %v752 = vsel %vm744, %v751, %v750
        %v753 = vperm.slane %v547, %v732
        %v754 = vperm.slane %v548, %v734
        %v755 = vsel %vm736, %v754, %v753
        %v756 = vperm.slane %v549, %v738
        %v757 = vsel %vm740, %v756, %v755
        %v758 = vperm.slane %v550, %v742
        %v759 = vsel %vm744, %v758, %v757
        %v760 = vperm.slane %v551, %v732
        %v761 = vperm.slane %v552, %v734
        %v762 = vsel %vm736, %v761, %v760
        %v763 = vperm.slane %v553, %v738
        %v764 = vsel %vm740, %v763, %v762
        %v765 = vperm.slane %v554, %v742
        %v766 = vsel %vm744, %v765, %v764
        %v767 = vperm.slane %v555, %v732
        %v768 = vperm.slane %v556, %v734
        %v769 = vsel %vm736, %v768, %v767
        %v770 = vperm.slane %v557, %v738
        %v771 = vsel %vm740, %v770, %v769
        %v772 = vperm.slane %v558, %v742
        %v773 = vsel %vm744, %v772, %v771
        %v774 = vperm.slane %v559, %v732
        %v775 = vperm.slane %v560, %v734
        %v776 = vsel %vm736, %v775, %v774
        %v777 = vperm.slane %v561, %v738
        %v778 = vsel %vm740, %v777, %v776
        %v779 = vperm.slane %v562, %v742
        %v780 = vsel %vm744, %v779, %v778
        %v781 = vperm.slane %v563, %v732
        %v782 = vperm.slane %v564, %v734
        %v783 = vsel %vm736, %v782, %v781
        %v784 = vperm.slane %v565, %v738
        %v785 = vsel %vm740, %v784, %v783
        %v786 = vperm.slane %v566, %v742
        %v787 = vsel %vm744, %v786, %v785
        %v788 = vperm.slane %v567, %v732
        %v789 = vperm.slane %v568, %v734
        %v790 = vsel %vm736, %v789, %v788
        %v791 = vperm.slane %v569, %v738
        %v792 = vsel %vm740, %v791, %v790
        %v793 = vperm.slane %v570, %v742
        %v794 = vsel %vm744, %v793, %v792
        %v795 = vperm.slane %v571, %v732
        %v796 = vperm.slane %v572, %v734
        %v797 = vsel %vm736, %v796, %v795
        %v798 = vperm.slane %v573, %v738
        %v799 = vsel %vm740, %v798, %v797
        %v800 = vperm.slane %v574, %v742
        %v801 = vsel %vm744, %v800, %v799
        %v802 = vperm.slane %v575, %v732
        %v803 = vperm.slane %v576, %v734
        %v804 = vsel %vm736, %v803, %v802
        %v805 = vperm.slane %v577, %v738
        %v806 = vsel %vm740, %v805, %v804
        %v807 = vperm.slane %v578, %v742
        %v808 = vsel %vm744, %v807, %v806
        %v809 = vperm.slane %v579, %v732
        %v810 = vperm.slane %v580, %v734
        %v811 = vsel %vm736, %v810, %v809
        %v812 = vperm.slane %v581, %v738
        %v813 = vsel %vm740, %v812, %v811
        %v814 = vperm.slane %v582, %v742
        %v815 = vsel %vm744, %v814, %v813
        %v816 = vperm.slane %v583, %v732
        %v817 = vperm.slane %v584, %v734
        %v818 = vsel %vm736, %v817, %v816
        %v819 = vperm.slane %v585, %v738
        %v820 = vsel %vm740, %v819, %v818
        %v821 = vperm.slane %v586, %v742
        %v822 = vsel %vm744, %v821, %v820
        %v823 = vperm.slane %v587, %v732
        %v824 = vperm.slane %v588, %v734
        %v825 = vsel %vm736, %v824, %v823
        %v826 = vperm.slane %v589, %v738
        %v827 = vsel %vm740, %v826, %v825
        %v828 = vperm.slane %v590, %v742
        %v829 = vsel %vm744, %v828, %v827
        %v830 = vperm.slane %v591, %v732
        %v831 = vperm.slane %v592, %v734
        %v832 = vsel %vm736, %v831, %v830
        %v833 = vperm.slane %v593, %v738
        %v834 = vsel %vm740, %v833, %v832
        %v835 = vperm.slane %v594, %v742
        %v836 = vsel %vm744, %v835, %v834
        %v837 = vperm.slane %v595, %v732
        %v838 = vperm.slane %v596, %v734
        %v839 = vsel %vm736, %v838, %v837
        %v840 = vperm.slane %v597, %v738
        %v841 = vsel %vm740, %v840, %v839
        %v842 = vperm.slane %v598, %v742
        %v843 = vsel %vm744, %v842, %v841
        %v844 = vperm.slane %v599, %v732
        %v845 = vperm.slane %v600, %v734
        %v846 = vsel %vm736, %v845, %v844
        %v847 = vperm.slane %v601, %v738
        %v848 = vsel %vm740, %v847, %v846
        %v849 = vperm.slane %v602, %v742
        %v850 = vsel %vm744, %v849, %v848
        %v851 = vperm.slane %v603, %v732
        %v852 = vperm.slane %v604, %v734
        %v853 = vsel %vm736, %v852, %v851
        %v854 = vperm.slane %v605, %v738
        %v855 = vsel %vm740, %v854, %v853
        %v856 = vperm.slane %v606, %v742
        %v857 = vsel %vm744, %v856, %v855
        %v858 = vperm.slane %v607, %v732
        %v859 = vperm.slane %v608, %v734
        %v860 = vsel %vm736, %v859, %v858
        %v861 = vperm.slane %v609, %v738
        %v862 = vsel %vm740, %v861, %v860
        %v863 = vperm.slane %v610, %v742
        %v864 = vsel %vm744, %v863, %v862
        %v865 = vperm.slane %v611, %v732
        %v866 = vperm.slane %v612, %v734
        %v867 = vsel %vm736, %v866, %v865
        %v868 = vperm.slane %v613, %v738
        %v869 = vsel %vm740, %v868, %v867
        %v870 = vperm.slane %v614, %v742
        %v871 = vsel %vm744, %v870, %v869
        %v872 = vperm.slane %v615, %v732
        %v873 = vperm.slane %v616, %v734
        %v874 = vsel %vm736, %v873, %v872
        %v875 = vperm.slane %v617, %v738
        %v876 = vsel %vm740, %v875, %v874
        %v877 = vperm.slane %v618, %v742
        %v878 = vsel %vm744, %v877, %v876
        %v879 = vperm.slane %v619, %v732
        %v880 = vperm.slane %v620, %v734
        %v881 = vsel %vm736, %v880, %v879
        %v882 = vperm.slane %v621, %v738
        %v883 = vsel %vm740, %v882, %v881
        %v884 = vperm.slane %v622, %v742
        %v885 = vsel %vm744, %v884, %v883
        %v886 = vperm.slane %v623, %v732
        %v887 = vperm.slane %v624, %v734
        %v888 = vsel %vm736, %v887, %v886
        %v889 = vperm.slane %v625, %v738
        %v890 = vsel %vm740, %v889, %v888
        %v891 = vperm.slane %v626, %v742
        %v892 = vsel %vm744, %v891, %v890
        %v893 = vperm.slane %v627, %v732
        %v894 = vperm.slane %v628, %v734
        %v895 = vsel %vm736, %v894, %v893
        %v896 = vperm.slane %v629, %v738
        %v897 = vsel %vm740, %v896, %v895
        %v898 = vperm.slane %v630, %v742
        %v899 = vsel %vm744, %v898, %v897
        %v900 = vperm.slane %v631, %v732
        %v901 = vperm.slane %v632, %v734
        %v902 = vsel %vm736, %v901, %v900
        %v903 = vperm.slane %v633, %v738
        %v904 = vsel %vm740, %v903, %v902
        %v905 = vperm.slane %v634, %v742
        %v906 = vsel %vm744, %v905, %v904
        %vm907 = vcmask 1041409
        %v908 = vsel %vm907, %v752, %v745
        %vm909 = vcmask 1042434
        %v910 = vsel %vm909, %v759, %v908
        %vm911 = vcmask 1043459
        %v912 = vsel %vm911, %v766, %v910
        %vm913 = vcmask 1044484
        %v914 = vsel %vm913, %v773, %v912
        %vm915 = vcmask 1045509
        %v916 = vsel %vm915, %v780, %v914
        %vm917 = vcmask 1046534
        %v918 = vsel %vm917, %v787, %v916
        %vm919 = vcmask 1047559
        %v920 = vsel %vm919, %v794, %v918
        %v921 = vsel %vm907, %v808, %v801
        %v922 = vsel %vm909, %v815, %v921
        %v923 = vsel %vm911, %v822, %v922
        %v924 = vsel %vm913, %v829, %v923
        %v925 = vsel %vm915, %v836, %v924
        %v926 = vsel %vm917, %v843, %v925
        %v927 = vsel %vm919, %v850, %v926
        %v928 = vsel %vm907, %v864, %v857
        %v929 = vsel %vm909, %v871, %v928
        %v930 = vsel %vm911, %v878, %v929
        %v931 = vsel %vm913, %v885, %v930
        %v932 = vsel %vm915, %v892, %v931
        %v933 = vsel %vm917, %v899, %v932
        %v934 = vsel %vm919, %v906, %v933
        %vm938 = vcmask 261120
        %939 = vst.msk [vmem:[%s142] sm:$0xff] %vm938, %v920
        %940 = vst.msk [vmem:[%s142 + $0x8] sm:$0xff] %vm938, %v927
        %941 = vst.msk [vmem:[%s142 + $0x10] sm:$0xff] %vm938, %v934
        %s942 = sand.u32 %s49, 1
        %s943 = sand.u32 %s49, 1
        %s944 = smul.addr %s943, 24
        %s945 = scalar_lea.vmem [#allocation4], %s944
        // Predicated region
        $region29: #{tpu_custom_call.1} parent=23 // pred_check
          %p946 = pneg %p59
        $region30: #{tpu_custom_call.1} parent=23 // pred_check_branch
          %948 = sbr.rel (%p946) target = $region32
        $region31: #{tpu_custom_call.1} parent=23 // pred_region
          %s949 = smul.u32 3, %s15
          %s950 = ssub.s32 5, %s949
          %p951 = scmp.lt.s32.totalorder %s950, 3
          %s952 = scalar_select %p951, %s950, 3
          %s953 = smul.u32 8, %s952
          %p954 = scmp.ne.s32.totalorder 0, %s953
          %s955 = smul.addr %s949, 8
          %s956 = scalar_lea.vmem %s1, %s955
          // Predicated region
          $region33: #{tpu_custom_call.1} parent=31 // pred_check
            %p957 = pneg %p954
          $region34: #{tpu_custom_call.1} parent=31 // pred_check_branch
            %959 = sbr.rel (%p957) target = $region36
          $region35: #{tpu_custom_call.1} parent=31 // pred_region
            // Predicated region
            $region37: #{tpu_custom_call.1} parent=35 // pred_check
              _
            $region38: #{tpu_custom_call.1} parent=35 // pred_check_branch
              %961 = sbr.rel (0) target = $region40
            $region39: #{tpu_custom_call.1} parent=35 // pred_region
              // Predicated region
              $region59: #{tpu_custom_call.1} parent=39 // pred_check
                _
              $region60: #{tpu_custom_call.1} parent=39 // pred_check_branch
                %1016 = sbr.rel (0) target = $region62
              $region61: #{tpu_custom_call.1} parent=39 // pred_region
                %s1017 = sdiv.u32.pop %s952, 3
                %s1018 = srem.u32.pop %s952, 3
                // While loop
                $region63: #{tpu_custom_call.1} parent=61 // loop_pre_header
                  _
                $region64: #{tpu_custom_call.1} parent=61 // loop_header
                  %s1020 = sphi 0, %s1022
                  %p1021 = scmp.ge.s32.totalorder %s1020, %s1017
                  %s1025 = sphi 0, %s1036
                  %s1026 = sphi %s945, %s1039
                  %s1027 = sphi %s956, %s1040
                $region65: #{tpu_custom_call.1} parent=61 // loop_header_branch
                  %1024 = sbr.rel (%p1021) target = $region69
                $region66: #{tpu_custom_call.1} parent=61 // loop_body
                  %v1028 = vld [vmem:[%s1026] sm:$0xff]
                  %1029 = vst [vmem:[%s1027] sm:$0xff] %v1028
                  %v1030 = vld [vmem:[%s1026 + $0x8] sm:$0xff]
                  %1031 = vst [vmem:[%s1027 + $0x8] sm:$0xff] %v1030
                  %v1032 = vld [vmem:[%s1026 + $0x10] sm:$0xff]
                  %1033 = vst [vmem:[%s1027 + $0x10] sm:$0xff] %v1032
                  %s1034 = sadd.s32 1, %s1025
                  %p1035 = scmp.ge.s32.totalorder %s1034, %s1017
                  %s1036 = scalar_select %p1035, 0, %s1034
                  %s1037 = smul.u32 %s1036, 24
                  %s1038 = smul.u32 %s1036, 24
                  %s1039 = scalar_lea.vmem %s945, %s1037 [#allocation4]
                  %s1040 = scalar_lea.vmem %s956, %s1038
                $region67: #{tpu_custom_call.1} parent=61 // loop_footer
                  %s1022 = sadd.s32 %s1020, 1
                $region68: #{tpu_custom_call.1} parent=61 // loop_footer_branch
                  %1019 = sbr.rel target = $region64
                $region69: #{tpu_custom_call.1} parent=61 // loop_exit
                  _
                %s1041 = sdiv.u32.pop %s952, 3
                %s1042 = srem.u32.pop %s952, 3
                %s1043 = smul.u32 %s1041, 3
                %s1044 = smul.u32 8, %s1043
                %s1045 = scalar_lea.vmem %s945, %s1044 [#allocation4]
                %s1046 = smul.u32 8, %s1043
                %s1047 = scalar_lea.vmem %s956, %s1046
                // While loop
                $region70: #{tpu_custom_call.1} parent=61 // loop_pre_header
                  _
                $region71: #{tpu_custom_call.1} parent=61 // loop_header
                  %s1049 = sphi 0, %s1051
                  %p1050 = scmp.ge.s32.totalorder %s1049, %s1042
                  %s1054 = sphi 0, %s1061
                  %s1055 = sphi %s1045, %s1064
                  %s1056 = sphi %s1047, %s1065
                $region72: #{tpu_custom_call.1} parent=61 // loop_header_branch
                  %1053 = sbr.rel (%p1050) target = $region76
                $region73: #{tpu_custom_call.1} parent=61 // loop_body
                  %v1057 = vld [vmem:[%s1055] sm:$0xff]
                  %1058 = vst [vmem:[%s1056] sm:$0xff] %v1057
                  %s1059 = sadd.s32 1, %s1054
                  %p1060 = scmp.ge.s32.totalorder %s1059, %s1042
                  %s1061 = scalar_select %p1060, 0, %s1059
                  %s1062 = smul.u32 %s1061, 8
                  %s1063 = smul.u32 %s1061, 8
                  %s1064 = scalar_lea.vmem %s1045, %s1062 [#allocation4]
                  %s1065 = scalar_lea.vmem %s1047, %s1063
                $region74: #{tpu_custom_call.1} parent=61 // loop_footer
                  %s1051 = sadd.s32 %s1049, 1
                $region75: #{tpu_custom_call.1} parent=61 // loop_footer_branch
                  %1048 = sbr.rel target = $region71
                $region76: #{tpu_custom_call.1} parent=61 // loop_exit
                  _
              $region62: #{tpu_custom_call.1} parent=39 // pred_fallthru
                _
              // Predicated region
              $region77: #{tpu_custom_call.1} parent=39 // pred_check
                _
              $region78: #{tpu_custom_call.1} parent=39 // pred_check_branch
                %1067 = sbr.rel target = $region80
              $region79: #{tpu_custom_call.1} parent=39 // pred_region
                _
              $region80: #{tpu_custom_call.1} parent=39 // pred_fallthru
                _
            $region40: #{tpu_custom_call.1} parent=35 // pred_fallthru
              _
            // Predicated region
            $region41: #{tpu_custom_call.1} parent=35 // pred_check
              _
            $region42: #{tpu_custom_call.1} parent=35 // pred_check_branch
              %963 = sbr.rel target = $region44
            $region43: #{tpu_custom_call.1} parent=35 // pred_region
              %s965 = ssub.s32 256, 1
              %s966 = sdiv.u32.pop %s952, 3
              %s967 = srem.u32.pop %s952, 3
              // While loop
              $region45: #{tpu_custom_call.1} parent=43 // loop_pre_header
                _
              $region46: #{tpu_custom_call.1} parent=43 // loop_header
                %s969 = sphi 0, %s971
                %p970 = scmp.ge.s32.totalorder %s969, %s966
                %s974 = sphi 0, %s985
                %s975 = sphi %s945, %s988
                %s976 = sphi %s956, %s989
              $region47: #{tpu_custom_call.1} parent=43 // loop_header_branch
                %973 = sbr.rel (%p970) target = $region51
              $region48: #{tpu_custom_call.1} parent=43 // loop_body
                %v977 = vld [vmem:[%s975] sm:%s965]
                %978 = vst [vmem:[%s976] sm:%s965] %v977
                %v979 = vld [vmem:[%s975 + $0x8] sm:%s965]
                %980 = vst [vmem:[%s976 + $0x8] sm:%s965] %v979
                %v981 = vld [vmem:[%s975 + $0x10] sm:%s965]
                %982 = vst [vmem:[%s976 + $0x10] sm:%s965] %v981
                %s983 = sadd.s32 1, %s974
                %p984 = scmp.ge.s32.totalorder %s983, %s966
                %s985 = scalar_select %p984, 0, %s983
                %s986 = smul.u32 %s985, 24
                %s987 = smul.u32 %s985, 24
                %s988 = scalar_lea.vmem %s945, %s986 [#allocation4]
                %s989 = scalar_lea.vmem %s956, %s987
              $region49: #{tpu_custom_call.1} parent=43 // loop_footer
                %s971 = sadd.s32 %s969, 1
              $region50: #{tpu_custom_call.1} parent=43 // loop_footer_branch
                %968 = sbr.rel target = $region46
              $region51: #{tpu_custom_call.1} parent=43 // loop_exit
                _
              %s990 = sdiv.u32.pop %s952, 3
              %s991 = srem.u32.pop %s952, 3
              %s992 = smul.u32 %s990, 3
              %s993 = smul.u32 8, %s992
              %s994 = scalar_lea.vmem %s945, %s993 [#allocation4]
              %s995 = smul.u32 8, %s992
              %s996 = scalar_lea.vmem %s956, %s995
              // While loop
              $region52: #{tpu_custom_call.1} parent=43 // loop_pre_header
                _
              $region53: #{tpu_custom_call.1} parent=43 // loop_header
                %s998 = sphi 0, %s1000
                %p999 = scmp.ge.s32.totalorder %s998, %s991
                %s1003 = sphi 0, %s1010
                %s1004 = sphi %s994, %s1013
                %s1005 = sphi %s996, %s1014
              $region54: #{tpu_custom_call.1} parent=43 // loop_header_branch
                %1002 = sbr.rel (%p999) target = $region58
              $region55: #{tpu_custom_call.1} parent=43 // loop_body
                %v1006 = vld [vmem:[%s1004] sm:%s965]
                %1007 = vst [vmem:[%s1005] sm:%s965] %v1006
                %s1008 = sadd.s32 1, %s1003
                %p1009 = scmp.ge.s32.totalorder %s1008, %s991
                %s1010 = scalar_select %p1009, 0, %s1008
                %s1011 = smul.u32 %s1010, 8
                %s1012 = smul.u32 %s1010, 8
                %s1013 = scalar_lea.vmem %s994, %s1011 [#allocation4]
                %s1014 = scalar_lea.vmem %s996, %s1012
              $region56: #{tpu_custom_call.1} parent=43 // loop_footer
                %s1000 = sadd.s32 %s998, 1
              $region57: #{tpu_custom_call.1} parent=43 // loop_footer_branch
                %997 = sbr.rel target = $region53
              $region58: #{tpu_custom_call.1} parent=43 // loop_exit
                _
            $region44: #{tpu_custom_call.1} parent=35 // pred_fallthru
              _
          $region36: #{tpu_custom_call.1} parent=31 // pred_fallthru
            _
          %1068 = vnop
        $region32: #{tpu_custom_call.1} parent=23 // pred_fallthru
          _
      $region24: #{tpu_custom_call.1} parent=5 // pred_fallthru
        _
      %p1069 = scmp.le.s32.totalorder 2, %s10
      // Predicated region
      $region81: #{tpu_custom_call.1} parent=5 // pred_check
        %p1070 = pneg %p1069
      $region82: #{tpu_custom_call.1} parent=5 // pred_check_branch
        %1072 = sbr.rel (%p1070) target = $region84
      $region83: #{tpu_custom_call.1} parent=5 // pred_region
        %s1073 = ssub.s32 %s10, 2
        // Predicated region
        $region85: #{tpu_custom_call.1} parent=83 // pred_check
          %p1074 = pneg %p65
        $region86: #{tpu_custom_call.1} parent=83 // pred_check_branch
          %1076 = sbr.rel (%p1074) target = $region88
        $region87: #{tpu_custom_call.1} parent=83 // pred_region
          %s1077 = sand.u32 %s50, 1
          %s1078 = sand.u32 %s50, 1
          %s1079 = smul.addr %s1078, 24
          %s1080 = scalar_lea.vmem [#allocation4], %s1079
        $region88: #{tpu_custom_call.1} parent=83 // pred_fallthru
          _
      $region84: #{tpu_custom_call.1} parent=5 // pred_fallthru
        _
    $region6: #{tpu_custom_call.1} parent=1 // loop_footer
      %s14 = sadd.s32 1, %s10
    $region7: #{tpu_custom_call.1} parent=1 // loop_footer_branch
      %9 = sbr.rel target = $region3
    $region8: #{tpu_custom_call.1} parent=1 // loop_exit
      _
    %1081 = vsyncpa [#allocation3], 1
    %s1082 = scalar_lea.sflag [#allocation3], 1
    %1083 = vsyncpa %s1082, 1

</llo_original>
